<compile_context>
chip_gen: v6e
topology: v6e:2x2x1
jax: 0.10.0
libtpu: 0.0.40
codegen_flags: <defaults>
</compile_context>

<pallas_src>
import functools

import jax
import jax.numpy as jnp
from jax.experimental import pallas as pl
from jax.experimental.pallas import tpu as pltpu


def _round_up(x, m):
    return (x + m - 1) // m * m


def _pick_tile_k(d_hidden, max_tile=2048):
    """Largest 128-multiple <= max_tile that divides d_hidden, else full dim."""
    for cand in (2048, 1024, 512, 256, 128):
        if cand <= max_tile and d_hidden % cand == 0:
            return cand
    return d_hidden


def _ffn_kernel(x_ref, w1_ref, b1_ref, w2_ref, b2_ref, o_ref, acc_ref):
    """One (row-tile, hidden-chunk) step of relu(x@W1+b1)@W2+b2, f32 accum."""
    k = pl.program_id(1)

    @pl.when(k == 0)
    def _():
        # Fold the second bias into the accumulator init.
        acc_ref[...] = jnp.broadcast_to(
            b2_ref[...].astype(jnp.float32), acc_ref.shape)

    # First matmul on the hidden chunk, f32 accumulation on the MXU.
    h = jnp.dot(x_ref[...], w1_ref[...],
                preferred_element_type=jnp.float32)            # (TM, TK) f32
    # Bias + ReLU in f32 (keeps the VPU path f32 on v5e too).
    h = jnp.maximum(h + b1_ref[...].astype(jnp.float32), 0.0)
    # Second matmul chunk: cast h to the weight dtype (bf16 weights -> bf16
    # MXU inputs, f32 accumulation via preferred_element_type).
    acc_ref[...] += jnp.dot(h.astype(w2_ref.dtype), w2_ref[...],
                            preferred_element_type=jnp.float32)

    @pl.when(k == pl.num_programs(1) - 1)
    def _():
        # TODO(synk): Dropout is identity in eval/inference mode; training-mode
        # dropout (pltpu.prng_seed + prng_random_bits mask) is not applied.
        o_ref[...] = acc_ref[...].astype(o_ref.dtype)


@functools.partial(jax.jit, static_argnames=("tile_m", "tile_k"))
def feed_forward(x, w1, b1, w2, b2, *, tile_m=256, tile_k=None):
    """x: (B, T, d_model) -> (B, T, d_model). Fused Linear-ReLU-Linear."""
    B, T, d_model = x.shape
    d_hidden = w1.shape[1]
    M = B * T

    # Row tile: multiple of 8 (f32 sublane), clamped to (padded) M.
    tile_m = min(tile_m, _round_up(M, 8))
    tile_m = _round_up(tile_m, 8)
    M_pad = _round_up(M, tile_m)

    if tile_k is None:
        tile_k = _pick_tile_k(d_hidden)
    assert d_hidden % tile_k == 0

    x2 = x.reshape(M, d_model)
    if M_pad != M:
        x2 = jnp.pad(x2, ((0, M_pad - M), (0, 0)))
    b1_2 = b1.reshape(1, d_hidden)
    b2_2 = b2.reshape(1, d_model)

    grid = (M_pad // tile_m, d_hidden // tile_k)

    # Explicit scoped-VMEM budget derived from the tile footprint
    # (double-buffered inputs/outputs + f32 accumulator + in-flight hidden).
    itm = x.dtype.itemsize
    w_itm = w1.dtype.itemsize
    tile_bytes = (tile_m * d_model * itm          # x tile
                  + d_model * tile_k * w_itm      # W1 chunk
                  + tile_k * w_itm                # b1 chunk
                  + tile_k * d_model * w_itm      # W2 chunk
                  + d_model * w_itm               # b2
                  + tile_m * d_model * itm)       # out tile
    vmem_bytes = int(2 * tile_bytes
                     + tile_m * d_model * 4       # f32 accumulator scratch
                     + tile_m * tile_k * 4        # in-flight hidden tile
                     + (2 << 20))                 # slack
    vmem_bytes = min(max(vmem_bytes, 32 << 20), 64 << 20)

    flops = 2 * M_pad * d_model * d_hidden * 2
    bytes_accessed = (x2.size * itm
                      + w1.size * w_itm + w2.size * w_itm
                      + b1.size * w_itm + b2.size * w_itm
                      + M_pad * d_model * itm)

    out = pl.pallas_call(
        _ffn_kernel,
        out_shape=jax.ShapeDtypeStruct((M_pad, d_model), x.dtype),
        grid_spec=pltpu.PrefetchScalarGridSpec(
            num_scalar_prefetch=0,
            grid=grid,
            in_specs=[
                # x tile resident across the hidden axis.
                pl.BlockSpec((tile_m, d_model), lambda i, k: (i, 0)),
                # Weight / bias chunks stream along the hidden axis.
                pl.BlockSpec((d_model, tile_k), lambda i, k: (0, k)),   # W1
                pl.BlockSpec((1, tile_k), lambda i, k: (0, k)),         # b1
                pl.BlockSpec((tile_k, d_model), lambda i, k: (k, 0)),   # W2
                pl.BlockSpec((1, d_model), lambda i, k: (0, 0)),        # b2
            ],
            out_specs=pl.BlockSpec((tile_m, d_model), lambda i, k: (i, 0)),
            scratch_shapes=[pltpu.VMEM((tile_m, d_model), jnp.float32)],
        ),
        compiler_params=pltpu.CompilerParams(
            dimension_semantics=("parallel", "arbitrary"),
            vmem_limit_bytes=vmem_bytes),
        cost_estimate=pl.CostEstimate(
            flops=flops, transcendentals=0, bytes_accessed=bytes_accessed),
    )(x2, w1, b1_2, w2, b2_2)

    return out[:M].reshape(B, T, d_model)


def init_params(key, d_model, dtype=jnp.float32):
    """Deterministic init matching nn.Linear shapes (stored transposed)."""
    d_hidden = 4 * d_model
    k1, k2, k3, k4 = jax.random.split(key, 4)
    lim1 = 1.0 / jnp.sqrt(d_model)
    lim2 = 1.0 / jnp.sqrt(d_hidden)
    w1 = jax.random.uniform(k1, (d_model, d_hidden), dtype, -lim1, lim1)
    b1 = jax.random.uniform(k2, (d_hidden,), dtype, -lim1, lim1)
    w2 = jax.random.uniform(k3, (d_hidden, d_model), dtype, -lim2, lim2)
    b2 = jax.random.uniform(k4, (d_model,), dtype, -lim2, lim2)
    return w1, b1, w2, b2


if __name__ == "__main__":
    key = jax.random.PRNGKey(0)
    kx, kx2, kp = jax.random.split(key, 3)

    B, T, d_model = 2, 8, 32
    x = jax.random.normal(kx, (B, T, d_model), jnp.float32)
    w1, b1, w2, b2 = init_params(kp, d_model)

    y = feed_forward(x, w1, b1, w2, b2)
    y = jax.block_until_ready(y)

    # Reference in plain JAX (dropout is identity in eval mode).
    ref = jnp.maximum(x @ w1 + b1, 0.0) @ w2 + b2
    assert y.shape == (B, T, d_model)
    assert jnp.allclose(y, ref, atol=1e-5, rtol=1e-5)

    # Second check: M not divisible by the row tile (exercises the pad path).
    Bp, Tp = 2, 5
    xp = jax.random.normal(kx2, (Bp, Tp, d_model), jnp.float32)
    yp = jax.block_until_ready(feed_forward(xp, w1, b1, w2, b2))
    refp = jnp.maximum(xp @ w1 + b1, 0.0) @ w2 + b2
    assert yp.shape == (Bp, Tp, d_model)
    assert jnp.allclose(yp, refp, atol=1e-5, rtol=1e-5)

    print("KERNEL_OK")
</pallas_src>

<mosaic_0001>
module attributes {stable_mosaic.version = 11 : i64} {
  func.func @_ffn_kernel(%arg0: i32, %arg1: i32, %arg2: memref<16x32xf32, #tpu.memory_space<vmem>>, %arg3: memref<32x128xf32, #tpu.memory_space<vmem>>, %arg4: memref<1x128xf32, #tpu.memory_space<vmem>>, %arg5: memref<128x32xf32, #tpu.memory_space<vmem>>, %arg6: memref<1x32xf32, #tpu.memory_space<vmem>>, %arg7: memref<16x32xf32, #tpu.memory_space<vmem>>, %arg8: memref<16x32xf32, #tpu.memory_space<vmem>>) attributes {dimension_semantics = [#tpu.dimension_semantics<parallel>, #tpu.dimension_semantics<arbitrary>], iteration_bounds = array<i64: 1, 1>, scalar_prefetch = 0 : i64, scratch_operands = 1 : i64, tpu.core_type = #tpu.core_type<tc>, window_params = [{transform_indices = @transform_0, window_bounds = array<i64: 16, 32>}, {transform_indices = @transform_1, window_bounds = array<i64: 32, 128>}, {transform_indices = @transform_2, window_bounds = array<i64: 1, 128>}, {transform_indices = @transform_3, window_bounds = array<i64: 128, 32>}, {pipeline_mode = #tpu.pipeline_mode<synchronous>, transform_indices = @transform_4, window_bounds = array<i64: 1, 32>}, {transform_indices = @transform_5, window_bounds = array<i64: 16, 32>}]} {
    %c0_i32 = arith.constant 0 : i32
    %0 = arith.cmpi eq, %arg1, %c0_i32 : i32
    %1 = arith.extui %0 : i1 to i32
    %c0_i32_0 = arith.constant 0 : i32
    %2 = arith.cmpi ne, %1, %c0_i32_0 : i32
    scf.if %2 {
      %c0_16 = arith.constant 0 : index
      %c0_17 = arith.constant 0 : index
      %19 = vector.load %arg6[%c0_16, %c0_17] : memref<1x32xf32, #tpu.memory_space<vmem>>, vector<1x32xf32>
      %20 = vector.shape_cast %19 : vector<1x32xf32> to vector<1x32xf32>
      %21 = vector.broadcast %20 : vector<1x32xf32> to vector<16x32xf32>
      %c0_18 = arith.constant 0 : index
      %c0_19 = arith.constant 0 : index
      %22 = vector.load %arg8[%c0_18, %c0_19] : memref<16x32xf32, #tpu.memory_space<vmem>>, vector<16x32xf32>
      tpu.vector_store %arg8[%c0_18, %c0_19], %21 {strides = array<i32>} : memref<16x32xf32, #tpu.memory_space<vmem>>, vector<16x32xf32>,
    } else {
    }
    %c0 = arith.constant 0 : index
    %c0_1 = arith.constant 0 : index
    %3 = vector.load %arg2[%c0, %c0_1] : memref<16x32xf32, #tpu.memory_space<vmem>>, vector<16x32xf32>
    %c0_2 = arith.constant 0 : index
    %c0_3 = arith.constant 0 : index
    %4 = vector.load %arg3[%c0_2, %c0_3] : memref<32x128xf32, #tpu.memory_space<vmem>>, vector<32x128xf32>
    %cst = arith.constant dense<0.000000e+00> : vector<16x128xf32>
    %5 = tpu.matmul %3, %4, %cst {dimension_numbers = #tpu.dot_dimension_numbers<[1], [0], [0], [1], [0, 0, 1, 1], [], []>} : vector<16x32xf32>, vector<32x128xf32>, vector<16x128xf32> -> vector<16x128xf32>
    %c0_4 = arith.constant 0 : index
    %c0_5 = arith.constant 0 : index
    %6 = vector.load %arg4[%c0_4, %c0_5] : memref<1x128xf32, #tpu.memory_space<vmem>>, vector<1x128xf32>
    %7 = vector.broadcast %6 : vector<1x128xf32> to vector<16x128xf32>
    %8 = arith.addf %5, %7 : vector<16x128xf32>
    %cst_6 = arith.constant 0.000000e+00 : f32
    %9 = vector.broadcast %cst_6 : f32 to vector<16x128xf32>
    %10 = arith.maximumf %8, %9 : vector<16x128xf32>
    %c0_7 = arith.constant 0 : index
    %c0_8 = arith.constant 0 : index
    %11 = vector.load %arg8[%c0_7, %c0_8] : memref<16x32xf32, #tpu.memory_space<vmem>>, vector<16x32xf32>
    %c0_9 = arith.constant 0 : index
    %c0_10 = arith.constant 0 : index
    %12 = vector.load %arg5[%c0_9, %c0_10] : memref<128x32xf32, #tpu.memory_space<vmem>>, vector<128x32xf32>
    %cst_11 = arith.constant dense<0.000000e+00> : vector<16x32xf32>
    %13 = tpu.matmul %10, %12, %cst_11 {dimension_numbers = #tpu.dot_dimension_numbers<[1], [0], [0], [1], [0, 0, 1, 1], [], []>} : vector<16x128xf32>, vector<128x32xf32>, vector<16x32xf32> -> vector<16x32xf32>
    %14 = arith.addf %11, %13 : vector<16x32xf32>
    %c0_12 = arith.constant 0 : index
    %c0_13 = arith.constant 0 : index
    %15 = vector.load %arg8[%c0_12, %c0_13] : memref<16x32xf32, #tpu.memory_space<vmem>>, vector<16x32xf32>
    tpu.vector_store %arg8[%c0_12, %c0_13], %14 {strides = array<i32>} : memref<16x32xf32, #tpu.memory_space<vmem>>, vector<16x32xf32>,
    %c0_i32_14 = arith.constant 0 : i32
    %16 = arith.cmpi eq, %arg1, %c0_i32_14 : i32
    %17 = arith.extui %16 : i1 to i32
    %c0_i32_15 = arith.constant 0 : i32
    %18 = arith.cmpi ne, %17, %c0_i32_15 : i32
    scf.if %18 {
      %c0_16 = arith.constant 0 : index
      %c0_17 = arith.constant 0 : index
      %19 = vector.load %arg8[%c0_16, %c0_17] : memref<16x32xf32, #tpu.memory_space<vmem>>, vector<16x32xf32>
      %c0_18 = arith.constant 0 : index
      %c0_19 = arith.constant 0 : index
      %20 = vector.load %arg7[%c0_18, %c0_19] : memref<16x32xf32, #tpu.memory_space<vmem>>, vector<16x32xf32>
      tpu.vector_store %arg7[%c0_18, %c0_19], %19 {strides = array<i32>} : memref<16x32xf32, #tpu.memory_space<vmem>>, vector<16x32xf32>,
    } else {
    }
    return
  }
  func.func @transform_0(%arg0: i32, %arg1: i32) -> (i32, i32) {
    %c0_i32 = arith.constant 0 : i32
    %c0_i32_0 = arith.constant 0 : i32
    return %arg0, %c0_i32 : i32, i32
  }
  func.func @transform_1(%arg0: i32, %arg1: i32) -> (i32, i32) {
    %c0_i32 = arith.constant 0 : i32
    %c0_i32_0 = arith.constant 0 : i32
    return %c0_i32, %arg1 : i32, i32
  }
  func.func @transform_2(%arg0: i32, %arg1: i32) -> (i32, i32) {
    %c0_i32 = arith.constant 0 : i32
    %c0_i32_0 = arith.constant 0 : i32
    return %c0_i32, %arg1 : i32, i32
  }
  func.func @transform_3(%arg0: i32, %arg1: i32) -> (i32, i32) {
    %c0_i32 = arith.constant 0 : i32
    %c0_i32_0 = arith.constant 0 : i32
    return %arg1, %c0_i32 : i32, i32
  }
  func.func @transform_4(%arg0: i32, %arg1: i32) -> (i32, i32) {
    %c0_i32 = arith.constant 0 : i32
    %c0_i32_0 = arith.constant 0 : i32
    %c0_i32_1 = arith.constant 0 : i32
    return %c0_i32, %c0_i32_0 : i32, i32
  }
  func.func @transform_5(%arg0: i32, %arg1: i32) -> (i32, i32) {
    %c0_i32 = arith.constant 0 : i32
    %c0_i32_0 = arith.constant 0 : i32
    return %arg0, %c0_i32 : i32, i32
  }
}

</mosaic_0001>

<llo_original>
// kernel: feed_forward.1
$region0: #{feed_forward.1}
  #allocation0 [shape = 'u32[]', space=smem, size = 0x4, offset = 0x4, fixed_abs, tag = 'smem constant byte address 0x4 - core index']
  #allocation1 [shape = 'u32[144,128]{1,0:T(1,128)}', space=vmem, size = 0x12000, scoped, tag = 'internal scratch']
  #allocation2 [shape = 'f32[16,32]{1,0:T(8,128)}', space=vmem, size = 0x2000, scoped, tag = 'scratch operand']
  %s0 = inlined_call_operand.vmem [shape: f32[16,32], index: 0, kind: input, shape index: {}]
  %s1 = inlined_call_operand.vmem [shape: f32[32,128], index: 1, kind: input, shape index: {}]
  %s2 = inlined_call_operand.vmem [shape: f32[1,128], index: 2, kind: input, shape index: {}]
  %s3 = inlined_call_operand.vmem [shape: f32[128,32], index: 3, kind: input, shape index: {}]
  %s4 = inlined_call_operand.vmem [shape: f32[1,32], index: 4, kind: input, shape index: {}]
  %s5 = inlined_call_operand.hbm [shape: f32[16,32], index: 5, kind: output, shape index: {}]
  %s6 = sld [smem:[#allocation0]]
  $region38: #{feed_forward.1} parent=0
    _
  %s8 = ssub.s32 1, %s6
  %s9 = scalar_select 0, %s8, %s6
  $region1: #{feed_forward.1} parent=0
    #allocation3 [shape = 'u8[8192]{0}', space=vmem, size = 0x2000, scoped, tag = 'output window, operand 0, single buffered']
    #allocation4 [shape = 's32[1]{0}', space=sflag, size = 0x4, scoped, tag = 'scoped memory for feed_forward.1']
    %10 = vsyncpa [#allocation4], 0
    // Predicated region
    $region2: #{feed_forward.1} parent=1 // pred_check
      _
    $region3: #{feed_forward.1} parent=1 // pred_check_branch
      %12 = sbr.rel (0) target = $region5
    $region4: #{feed_forward.1} parent=1 // pred_region
      _
    $region5: #{feed_forward.1} parent=1 // pred_fallthru
      _
    // Predicated region
    $region6: #{feed_forward.1} parent=1 // pred_check
      _
    $region7: #{feed_forward.1} parent=1 // pred_check_branch
      %14 = sbr.rel (0) target = $region9
    $region8: #{feed_forward.1} parent=1 // pred_region
      _
    $region9: #{feed_forward.1} parent=1 // pred_fallthru
      _
    // Predicated region
    $region10: #{feed_forward.1} parent=1 // pred_check
      _
    $region11: #{feed_forward.1} parent=1 // pred_check_branch
      %16 = sbr.rel (0) target = $region13
    $region12: #{feed_forward.1} parent=1 // pred_region
      _
    $region13: #{feed_forward.1} parent=1 // pred_fallthru
      _
    // Predicated region
    $region14: #{feed_forward.1} parent=1 // pred_check
      _
    $region15: #{feed_forward.1} parent=1 // pred_check_branch
      %18 = sbr.rel (0) target = $region17
    $region16: #{feed_forward.1} parent=1 // pred_region
      _
    $region17: #{feed_forward.1} parent=1 // pred_fallthru
      _
    // Predicated region
    $region18: #{feed_forward.1} parent=1 // pred_check
      _
    $region19: #{feed_forward.1} parent=1 // pred_check_branch
      %20 = sbr.rel (0) target = $region21
    $region20: #{feed_forward.1} parent=1 // pred_region
      _
    $region21: #{feed_forward.1} parent=1 // pred_fallthru
      _
    %p21 = scmp.eq.s32.totalorder 0, 0
    // Predicated region
    $region22: #{feed_forward.1} parent=1 // pred_check
      %p22 = pneg %p21
    $region23: #{feed_forward.1} parent=1 // pred_check_branch
      %24 = sbr.rel (%p22) target = $region25
    $region24: #{feed_forward.1} parent=1 // pred_region
      %v25 = vld [vmem:[%s4] sm:$0x1]
      %v27 = vlaneseq
      %v28 = vshrl.u32 %v27, 7
      %v29 = vsub.s32 0, %v28
      %v30 = vrot.slane %v25, %v29
      %vm32 = vcmask 261120
      %33 = vst.msk [vmem:[#allocation2] sm:$0xff] %vm32, %v30
      %34 = vst.msk [vmem:[#allocation2 + $0x8] sm:$0xff] %vm32, %v30
    $region25: #{feed_forward.1} parent=1 // pred_fallthru
      _
    %v35 = vld [vmem:[%s0] sm:$0xff]
    %v36 = vld [vmem:[%s0 + $0x8] sm:$0xff]
    %v37 = vld [vmem:[%s1] sm:$0xff]
    %v38 = vld [vmem:[%s1 + $0x8] sm:$0xff]
    %v39 = vld [vmem:[%s1 + $0x10] sm:$0xff]
    %v40 = vld [vmem:[%s1 + $0x18] sm:$0xff]
    %v41 = vld [vmem:[%s2] sm:$0x1]
    %v43 = vlaneseq
    %v44 = vshrl.u32 %v43, 7
    %v45 = vsub.s32 0, %v44
    %v46 = vrot.slane %v41, %v45
    %vm48 = vcmask 261120
    %v50 = vsel %vm48, %v35, 0
    %v53 = vsel %vm48, %v36, 0
    %55 = vmatprep.subr.mxu0 0.0
    %56 = vmatpush1.msra.mxu0 0.0
    %57 = vmatprep.subr.mxu0 0.0
    %58 = vmatpush1.msra.mxu0 0.0
    %59 = vmatprep.subr.mxu0 0.0
    %60 = vmatpush1.msra.mxu0 0.0
    %61 = vmatprep.subr.mxu0 0.0
    %62 = vmatpush1.msra.mxu0 0.0
    %63 = vmatprep.subr.mxu0 0.0
    %64 = vmatpush1.msra.mxu0 0.0
    %65 = vmatprep.subr.mxu0 0.0
    %66 = vmatpush1.msra.mxu0 0.0
    %67 = vmatprep.subr.mxu0 0.0
    %68 = vmatpush1.msra.mxu0 0.0
    %69 = vmatprep.subr.mxu0 0.0
    %70 = vmatpush1.msra.mxu0 0.0
    %71 = vmatprep.subr.mxu0 0.0
    %72 = vmatpush1.msra.mxu0 0.0
    %73 = vmatprep.subr.mxu0 0.0
    %74 = vmatpush1.msra.mxu0 0.0
    %75 = vmatprep.subr.mxu0 0.0
    %76 = vmatpush1.msra.mxu0 0.0
    %77 = vmatprep.subr.mxu0 0.0
    %78 = vmatpush1.msra.mxu0 0.0
    %79 = vmatprep.subr.mxu0 0.0
    %80 = vmatpush1.msra.mxu0 %v40
    %81 = vmatprep.subr.mxu0 0.0
    %82 = vmatpush1.msra.mxu0 %v39
    %83 = vmatprep.subr.mxu0 0.0
    %84 = vmatpush1.msra.mxu0 %v38
    %85 = vmatprep.subr.mxu0 0.0
    %86 = vmatpush1.msra.mxu0 %v37
    %87 = vmatprep.subr.mxu0 0.0
    %88 = vmatpush2.msra.mxu0 0.0
    %89 = vmatprep.subr.mxu0 0.0
    %90 = vmatpush2.msra.mxu0 0.0
    %91 = vmatprep.subr.mxu0 0.0
    %92 = vmatpush2.msra.mxu0 0.0
    %93 = vmatprep.subr.mxu0 0.0
    %94 = vmatpush2.msra.mxu0 0.0
    %95 = vmatprep.subr.mxu0 0.0
    %96 = vmatpush2.msra.mxu0 0.0
    %97 = vmatprep.subr.mxu0 0.0
    %98 = vmatpush2.msra.mxu0 0.0
    %99 = vmatprep.subr.mxu0 0.0
    %100 = vmatpush2.msra.mxu0 0.0
    %101 = vmatprep.subr.mxu0 0.0
    %102 = vmatpush2.msra.mxu0 0.0
    %103 = vmatprep.subr.mxu0 0.0
    %104 = vmatpush2.msra.mxu0 0.0
    %105 = vmatprep.subr.mxu0 0.0
    %106 = vmatpush2.msra.mxu0 0.0
    %107 = vmatprep.subr.mxu0 0.0
    %108 = vmatpush2.msra.mxu0 0.0
    %109 = vmatprep.subr.mxu0 0.0
    %110 = vmatpush2.msra.mxu0 0.0
    %111 = vmatprep.subr.mxu0 0.0
    %112 = vmatpush2.msra.mxu0 0.0
    %113 = vmatprep.subr.mxu0 0.0
    %114 = vmatpush2.msra.mxu0 0.0
    %115 = vmatprep.subr.mxu0 0.0
    %116 = vmatpush2.msra.mxu0 0.0
    %117 = vmatprep.subr.mxu0 0.0
    %118 = vmatpush2.msra.mxu0 0.0
    %119 = vmatprep.mubr.f32.mxu0 0.0
    %120 = vmatmul.mubr.f32.gmra.mxu0 %v50
    %v121 = vpop.f32.mrf.mxu0
    %v122 = vadd.f32 %v46, %v121
    %v123 = vpop.f32.mrf.mxu0
    %124 = vmatprep.mubr.f32.mxu0 0.0
    %125 = vmatmul.mubr.f32.gmra.mxu0 %v53
    %v126 = vpop.f32.mrf.mxu0
    %v127 = vadd.f32 %v46, %v126
    %v128 = vpop.f32.mrf.mxu0
    %129 = vdwg.mxu0
    %v130 = vmax.f32 %v122, 0.0
    %v131 = vmax.f32 %v127, 0.0
    %v132 = vld [vmem:[#allocation2] sm:$0xff]
    %v133 = vld [vmem:[#allocation2 + $0x8] sm:$0xff]
    %v134 = vld [vmem:[%s3] sm:$0xff]
    %v135 = vld [vmem:[%s3 + $0x8] sm:$0xff]
    %v136 = vld [vmem:[%s3 + $0x10] sm:$0xff]
    %v137 = vld [vmem:[%s3 + $0x18] sm:$0xff]
    %v138 = vld [vmem:[%s3 + $0x20] sm:$0xff]
    %v139 = vld [vmem:[%s3 + $0x28] sm:$0xff]
    %v140 = vld [vmem:[%s3 + $0x30] sm:$0xff]
    %v141 = vld [vmem:[%s3 + $0x38] sm:$0xff]
    %v142 = vld [vmem:[%s3 + $0x40] sm:$0xff]
    %v143 = vld [vmem:[%s3 + $0x48] sm:$0xff]
    %v144 = vld [vmem:[%s3 + $0x50] sm:$0xff]
    %v145 = vld [vmem:[%s3 + $0x58] sm:$0xff]
    %v146 = vld [vmem:[%s3 + $0x60] sm:$0xff]
    %v147 = vld [vmem:[%s3 + $0x68] sm:$0xff]
    %v148 = vld [vmem:[%s3 + $0x70] sm:$0xff]
    %v149 = vld [vmem:[%s3 + $0x78] sm:$0xff]
    %150 = vmatprep.subr.mxu0 0.0
    %151 = vmatpush1.msra.mxu0 %v149
    %152 = vmatprep.subr.mxu0 0.0
    %153 = vmatpush1.msra.mxu0 %v148
    %154 = vmatprep.subr.mxu0 0.0
    %155 = vmatpush1.msra.mxu0 %v147
    %156 = vmatprep.subr.mxu0 0.0
    %157 = vmatpush1.msra.mxu0 %v146
    %158 = vmatprep.subr.mxu0 0.0
    %159 = vmatpush1.msra.mxu0 %v145
    %160 = vmatprep.subr.mxu0 0.0
    %161 = vmatpush1.msra.mxu0 %v144
    %162 = vmatprep.subr.mxu0 0.0
    %163 = vmatpush1.msra.mxu0 %v143
    %164 = vmatprep.subr.mxu0 0.0
    %165 = vmatpush1.msra.mxu0 %v142
    %166 = vmatprep.subr.mxu0 0.0
    %167 = vmatpush1.msra.mxu0 %v141
    %168 = vmatprep.subr.mxu0 0.0
    %169 = vmatpush1.msra.mxu0 %v140
    %170 = vmatprep.subr.mxu0 0.0
    %171 = vmatpush1.msra.mxu0 %v139
    %172 = vmatprep.subr.mxu0 0.0
    %173 = vmatpush1.msra.mxu0 %v138
    %174 = vmatprep.subr.mxu0 0.0
    %175 = vmatpush1.msra.mxu0 %v137
    %176 = vmatprep.subr.mxu0 0.0
    %177 = vmatpush1.msra.mxu0 %v136
    %178 = vmatprep.subr.mxu0 0.0
    %179 = vmatpush1.msra.mxu0 %v135
    %180 = vmatprep.subr.mxu0 0.0
    %181 = vmatpush1.msra.mxu0 %v134
    %182 = vmatprep.subr.mxu0 0.0
    %183 = vmatpush2.msra.mxu0 0.0
    %184 = vmatprep.subr.mxu0 0.0
    %185 = vmatpush2.msra.mxu0 0.0
    %186 = vmatprep.subr.mxu0 0.0
    %187 = vmatpush2.msra.mxu0 0.0
    %188 = vmatprep.subr.mxu0 0.0
    %189 = vmatpush2.msra.mxu0 0.0
    %190 = vmatprep.subr.mxu0 0.0
    %191 = vmatpush2.msra.mxu0 0.0
    %192 = vmatprep.subr.mxu0 0.0
    %193 = vmatpush2.msra.mxu0 0.0
    %194 = vmatprep.subr.mxu0 0.0
    %195 = vmatpush2.msra.mxu0 0.0
    %196 = vmatprep.subr.mxu0 0.0
    %197 = vmatpush2.msra.mxu0 0.0
    %198 = vmatprep.subr.mxu0 0.0
    %199 = vmatpush2.msra.mxu0 0.0
    %200 = vmatprep.subr.mxu0 0.0
    %201 = vmatpush2.msra.mxu0 0.0
    %202 = vmatprep.subr.mxu0 0.0
    %203 = vmatpush2.msra.mxu0 0.0
    %204 = vmatprep.subr.mxu0 0.0
    %205 = vmatpush2.msra.mxu0 0.0
    %206 = vmatprep.subr.mxu0 0.0
    %207 = vmatpush2.msra.mxu0 0.0
    %208 = vmatprep.subr.mxu0 0.0
    %209 = vmatpush2.msra.mxu0 0.0
    %210 = vmatprep.subr.mxu0 0.0
    %211 = vmatpush2.msra.mxu0 0.0
    %212 = vmatprep.subr.mxu0 0.0
    %213 = vmatpush2.msra.mxu0 0.0
    %214 = vmatprep.mubr.f32.mxu0 0.0
    %215 = vmatmul.mubr.f32.gmra.mxu0 %v130
    %v216 = vpop.f32.mrf.mxu0
    %v217 = vadd.f32 0.0, %v216
    %v218 = vpop.f32.mrf.mxu0
    %219 = vmatprep.mubr.f32.mxu0 0.0
    %220 = vmatmul.mubr.f32.gmra.mxu0 %v131
    %v221 = vpop.f32.mrf.mxu0
    %v222 = vadd.f32 0.0, %v221
    %v223 = vpop.f32.mrf.mxu0
    %224 = vdwg.mxu0
    %v225 = vadd.f32 %v132, %v217
    %v226 = vadd.f32 %v133, %v222
    %227 = vst.msk [vmem:[#allocation2] sm:$0xff] %vm48, %v225
    %228 = vst.msk [vmem:[#allocation2 + $0x8] sm:$0xff] %vm48, %v226
    // Predicated region
    $region26: #{feed_forward.1} parent=1 // pred_check
      %p229 = pneg %p21
    $region27: #{feed_forward.1} parent=1 // pred_check_branch
      %231 = sbr.rel (%p229) target = $region29
    $region28: #{feed_forward.1} parent=1 // pred_region
      %v232 = vld [vmem:[#allocation2] sm:$0xff]
      %v233 = vld [vmem:[#allocation2 + $0x8] sm:$0xff]
      %234 = vst.msk [vmem:[#allocation3] sm:$0xff] %vm48, %v232
      %235 = vst.msk [vmem:[#allocation3 + $0x8] sm:$0xff] %vm48, %v233
    $region29: #{feed_forward.1} parent=1 // pred_fallthru
      _
    // Predicated region
    $region30: #{feed_forward.1} parent=1 // pred_check
      _
    $region31: #{feed_forward.1} parent=1 // pred_check_branch
      %237 = sbr.rel (0) target = $region33
    $region32: #{feed_forward.1} parent=1 // pred_region
      %s239 = ssub.s32 256, 256
      %240 = vsyncadd [#allocation4], %s239
      %s241 = sshll.u32 [#allocation3], 4
      %s242 = int_to_ptr.vmem [resolvable:$true] %s241
      %247 = dma.vmem_to_hbm [thread:$0]  %s242, 256, %s5, [#allocation4], 128, 128, 8
    $region33: #{feed_forward.1} parent=1 // pred_fallthru
      _
    // Predicated region
    $region34: #{feed_forward.1} parent=1 // pred_check
      _
    $region35: #{feed_forward.1} parent=1 // pred_check_branch
      %249 = sbr.rel (0) target = $region37
    $region36: #{feed_forward.1} parent=1 // pred_region
      %250 = dma.done [#allocation4], 256
    $region37: #{feed_forward.1} parent=1 // pred_fallthru
      _
    %251 = vsyncpa [#allocation4], 1

</llo_original>
